<compile_context>
chip_gen: v6e
topology: v6e:2x2x1
jax: 0.10.0
libtpu: 0.0.40
codegen_flags: <defaults>
</compile_context>

<pallas_src>
import functools

import jax
import jax.numpy as jnp
from jax.experimental import pallas as pl
from jax.experimental.pallas import tpu as pltpu

ALPHA = 0.75
GAMMA = 2  # integer gamma -> exact square, no transcendental pow

_LANES = 128
_MAX_BLOCK_ROWS = 4096  # 2 MiB f32 per input tile; 2 inputs x 2 bufs = 8 MiB VMEM


def _focal_sum_kernel(p_ref, t_ref, out_ref, acc_ref, *, gamma, rows, needs_mask):
    i = pl.program_id(1)            # sequential reduction axis
    n_inner = pl.num_programs(1)

    @pl.when(i == 0)
    def _init():
        acc_ref[...] = jnp.zeros_like(acc_ref)

    p = p_ref[...].astype(jnp.float32)
    t = t_ref[...].astype(jnp.float32)

    block_rows, lanes = p_ref.shape

    # F.binary_cross_entropy clamps log terms at -100 (PyTorch semantics).
    # Rearranged:  s = t*log_p + (1-t)*log_1mp  = -bce   (saves a mul + negate)
    log_p = jnp.maximum(jnp.log(p), jnp.float32(-100.0))
    log_1mp = jnp.maximum(jnp.log(1.0 - p), jnp.float32(-100.0))
    s = t * (log_p - log_1mp) + log_1mp          # s <= 0
    pt = jnp.exp(s)                              # pt = exp(-bce)
    one_m_pt = 1.0 - pt
    if float(gamma) == float(int(gamma)) and gamma >= 0:
        w = jax.lax.integer_pow(one_m_pt, int(gamma))   # VPU muls, no EUP pow
    else:
        w = one_m_pt ** jnp.float32(gamma)

    # Accumulate g = w * s; the final negate (bce = -s) is applied once per
    # partition in the finalize step instead of per element.
    g = w * s

    if needs_mask:
        # Only compiled in when the grid tiling is ragged (or a partition got
        # a duplicate clamped tile).  Single row-compare + select on the
        # output; garbage from the partially-OOB edge block is safely dropped
        # by the select (no arithmetic on masked lanes reaches the sum).
        part = pl.program_id(0)
        tile = part * n_inner + i                  # logical (unclamped) tile
        valid_rows = rows - tile * block_rows      # may be <= 0 -> all masked
        row = jax.lax.broadcasted_iota(jnp.int32, (block_rows, lanes), 0)
        g = jnp.where(row < valid_rows, g, jnp.float32(0.0))

    # Accumulate into a multi-vreg VMEM buffer: independent elementwise VPU
    # adds (ILP), no cross-lane work until finalize.
    acc_rows = acc_ref.shape[0]
    acc_ref[...] += g.reshape(block_rows // acc_rows, acc_rows, lanes).sum(axis=0)

    @pl.when(i == n_inner - 1)
    def _finalize():
        # Single expensive cross-lane/sublane reduction per partition;
        # negate folds bce = -s.
        out_ref[0, 0] = -jnp.sum(acc_ref[...])


def focal_loss(inputs, targets, alpha=ALPHA, gamma=GAMMA, reduction="mean",
               max_block_rows=_MAX_BLOCK_ROWS):
    """Pallas TPU focal loss. inputs are probabilities in [0,1], same shape as targets."""
    assert inputs.shape == targets.shape
    n_total = inputs.size

    p_flat = inputs.reshape(-1)          # keep original dtype; upcast in-kernel
    t_flat = targets.reshape(-1)

    rows = -(-n_total // _LANES)          # cdiv
    padded = rows * _LANES
    if padded != n_total:
        # TODO(synk): jnp.pad materializes a full HBM copy of BOTH inputs
        # (~3x traffic for this mem-bound kernel).  If large non-128-aligned
        # inputs matter, switch this case to memory_space=pl.ANY + manual
        # pltpu.make_async_copy of aligned chunks with a masked final chunk.
        # Padding with (p=1, t=1) contributes exactly zero loss -> no mask.
        p_flat = jnp.pad(p_flat, (0, padded - n_total), constant_values=1)
        t_flat = jnp.pad(t_flat, (0, padded - n_total), constant_values=1)
    p2 = p_flat.reshape(rows, _LANES)     # free for contiguous arrays
    t2 = t_flat.reshape(rows, _LANES)

    if rows <= max_block_rows:
        block_rows = rows                 # single tile == full dim (8-row rule ok)
    else:
        assert max_block_rows % 8 == 0
        block_rows = max_block_rows
    n_tiles = -(-rows // block_rows)

    # Unconditional 2-way split of the reduction whenever there is more than
    # one tile: keeps both v7x TensorCores busy, near-no-op elsewhere.
    n_parts = 2 if n_tiles >= 2 else 1
    n_inner = -(-n_tiles // n_parts)
    total_tiles = n_parts * n_inner

    # Mask only when the tiling is ragged / a partition has a spare tile.
    needs_mask = (total_tiles * block_rows != rows)

    if total_tiles == n_tiles:
        index_map = lambda p, i: (p * n_inner + i, 0)
    else:
        # Odd tile count: clamp the spare tile onto the last real tile; its
        # contribution is masked to zero in-kernel (valid_rows <= 0).
        last_tile = n_tiles - 1
        index_map = lambda p, i: (jnp.minimum(p * n_inner + i, last_tile), 0)

    if block_rows % 32 == 0:
        acc_rows = 32     # 4 vregs of independent accumulators
    elif block_rows % 8 == 0:
        acc_rows = 8
    else:
        acc_rows = 1

    kernel = functools.partial(
        _focal_sum_kernel, gamma=gamma, rows=rows, needs_mask=needs_mask)

    partials = pl.pallas_call(
        kernel,
        out_shape=jax.ShapeDtypeStruct((n_parts, 1), jnp.float32),
        grid_spec=pltpu.PrefetchScalarGridSpec(
            num_scalar_prefetch=0,
            grid=(n_parts, n_inner),
            in_specs=[
                pl.BlockSpec((block_rows, _LANES), index_map),
                pl.BlockSpec((block_rows, _LANES), index_map),
            ],
            out_specs=pl.BlockSpec(
                (1, 1), lambda p, i: (p, 0),
                memory_space=pltpu.MemorySpace.SMEM),
            scratch_shapes=[pltpu.VMEM((acc_rows, _LANES), jnp.float32)],
        ),
        compiler_params=pltpu.CompilerParams(
            dimension_semantics=("parallel", "arbitrary"),
        ),
    )(p2, t2)

    total = jnp.float32(alpha) * jnp.sum(partials)

    if reduction == "mean":
        return total / jnp.float32(n_total)
    elif reduction == "sum":
        return total
    else:
        # TODO(synk): expose elementwise F_loss output for reduction='none' if needed.
        raise NotImplementedError("only 'mean' and 'sum' reductions are implemented")


def _focal_loss_ref(inputs, targets, alpha=ALPHA, gamma=GAMMA):
    p = inputs.astype(jnp.float32)
    t = targets.astype(jnp.float32)
    log_p = jnp.maximum(jnp.log(p), -100.0)
    log_1mp = jnp.maximum(jnp.log(1.0 - p), -100.0)
    bce = -(t * log_p + (1.0 - t) * log_1mp)
    pt = jnp.exp(-bce)
    return jnp.mean(alpha * (1.0 - pt) ** gamma * bce)


if __name__ == "__main__":
    key = jax.random.PRNGKey(0)
    k1, k2, k3, k4 = jax.random.split(key, 4)

    # Primary test: NCHW-like shape; inputs are post-sigmoid probabilities,
    # targets are soft labels in [0,1].  2048 elements -> 128-aligned,
    # zero-copy reshape, single tile, no mask.
    shape = (2, 4, 16, 16)
    inputs = jax.random.uniform(k1, shape, jnp.float32, minval=1e-4, maxval=1.0 - 1e-4)
    targets = jax.random.uniform(k2, shape, jnp.float32)

    out = focal_loss(inputs, targets)
    out = jax.block_until_ready(out)
    ref = _focal_loss_ref(inputs, targets)
    assert jnp.allclose(out, ref, rtol=1e-5, atol=1e-6), (out, ref)

    # Exercise the 2-partition split path (rows=16, block_rows=8, grid=(2,1)).
    out2 = jax.block_until_ready(focal_loss(inputs, targets, max_block_rows=8))
    assert jnp.allclose(out2, ref, rtol=1e-5, atol=1e-6), (out2, ref)

    # Exercise the ragged-tile mask path (rows=24, block_rows=16 -> last tile
    # partially OOB and masked in-kernel).
    shape3 = (2, 4, 16, 24)
    in3 = jax.random.uniform(k3, shape3, jnp.float32, minval=1e-4, maxval=1.0 - 1e-4)
    tg3 = jax.random.uniform(k4, shape3, jnp.float32)
    out3 = jax.block_until_ready(focal_loss(in3, tg3, max_block_rows=16))
    ref3 = _focal_loss_ref(in3, tg3)
    assert jnp.allclose(out3, ref3, rtol=1e-5, atol=1e-6), (out3, ref3)

    # Exercise the non-128-aligned pad fallback (77 elements; pad with 1s
    # contributes zero loss, no mask).
    shape4 = (7, 11)
    in4 = jax.random.uniform(k1, shape4, jnp.float32, minval=1e-4, maxval=1.0 - 1e-4)
    tg4 = jax.random.uniform(k2, shape4, jnp.float32)
    out4 = jax.block_until_ready(focal_loss(in4, tg4))
    ref4 = _focal_loss_ref(in4, tg4)
    assert jnp.allclose(out4, ref4, rtol=1e-5, atol=1e-6), (out4, ref4)

    print("KERNEL_OK")
</pallas_src>

<mosaic_0001>
module attributes {stable_mosaic.version = 11 : i64} {
  func.func @_focal_sum_kernel(%arg0: i32, %arg1: i32, %arg2: memref<16x128xf32, #tpu.memory_space<vmem>>, %arg3: memref<16x128xf32, #tpu.memory_space<vmem>>, %arg4: memref<1x1xf32, #tpu.memory_space<smem>>, %arg5: memref<8x128xf32, #tpu.memory_space<vmem>>) attributes {dimension_semantics = [#tpu.dimension_semantics<parallel>, #tpu.dimension_semantics<arbitrary>], iteration_bounds = array<i64: 1, 1>, scalar_prefetch = 0 : i64, scratch_operands = 1 : i64, tpu.core_type = #tpu.core_type<tc>, window_params = [{transform_indices = @transform_0, window_bounds = array<i64: 16, 128>}, {transform_indices = @transform_1, window_bounds = array<i64: 16, 128>}, {transform_indices = @transform_2, window_bounds = array<i64: 1, 1>}]} {
    %c0_i32 = arith.constant 0 : i32
    %0 = arith.cmpi eq, %arg1, %c0_i32 : i32
    %1 = arith.extui %0 : i1 to i32
    %c0_i32_0 = arith.constant 0 : i32
    %2 = arith.cmpi ne, %1, %c0_i32_0 : i32
    scf.if %2 {
      %cst_14 = arith.constant 0.000000e+00 : f32
      %29 = vector.broadcast %cst_14 : f32 to vector<8x128xf32>
      %c0_15 = arith.constant 0 : index
      %c0_16 = arith.constant 0 : index
      %30 = vector.load %arg5[%c0_15, %c0_16] : memref<8x128xf32, #tpu.memory_space<vmem>>, vector<8x128xf32>
      tpu.vector_store %arg5[%c0_15, %c0_16], %29 {strides = array<i32>} : memref<8x128xf32, #tpu.memory_space<vmem>>, vector<8x128xf32>,
    } else {
    }
    %c0 = arith.constant 0 : index
    %c0_1 = arith.constant 0 : index
    %3 = vector.load %arg2[%c0, %c0_1] : memref<16x128xf32, #tpu.memory_space<vmem>>, vector<16x128xf32>
    %c0_2 = arith.constant 0 : index
    %c0_3 = arith.constant 0 : index
    %4 = vector.load %arg3[%c0_2, %c0_3] : memref<16x128xf32, #tpu.memory_space<vmem>>, vector<16x128xf32>
    %5 = math.log %3 : vector<16x128xf32>
    %cst = arith.constant -1.000000e+02 : f32
    %6 = vector.broadcast %cst : f32 to vector<16x128xf32>
    %7 = arith.maximumf %5, %6 : vector<16x128xf32>
    %cst_4 = arith.constant 1.000000e+00 : f32
    %8 = vector.broadcast %cst_4 : f32 to vector<16x128xf32>
    %9 = arith.subf %8, %3 : vector<16x128xf32>
    %10 = math.log %9 : vector<16x128xf32>
    %cst_5 = arith.constant -1.000000e+02 : f32
    %11 = vector.broadcast %cst_5 : f32 to vector<16x128xf32>
    %12 = arith.maximumf %10, %11 : vector<16x128xf32>
    %13 = arith.subf %7, %12 : vector<16x128xf32>
    %14 = arith.mulf %4, %13 : vector<16x128xf32>
    %15 = arith.addf %14, %12 : vector<16x128xf32>
    %16 = math.exp %15 : vector<16x128xf32>
    %cst_6 = arith.constant 1.000000e+00 : f32
    %17 = vector.broadcast %cst_6 : f32 to vector<16x128xf32>
    %18 = arith.subf %17, %16 : vector<16x128xf32>
    %19 = arith.mulf %18, %18 : vector<16x128xf32>
    %20 = arith.mulf %19, %15 : vector<16x128xf32>
    %c0_7 = arith.constant 0 : index
    %c0_8 = arith.constant 0 : index
    %21 = vector.load %arg5[%c0_7, %c0_8] : memref<8x128xf32, #tpu.memory_space<vmem>>, vector<8x128xf32>
    %22 = vector.shape_cast %20 : vector<16x128xf32> to vector<2x8x128xf32>
    %cst_9 = arith.constant dense<0.000000e+00> : vector<8x128xf32>
    %23 = vector.multi_reduction <add>, %22, %cst_9 [0] : vector<2x8x128xf32> to vector<8x128xf32>
    %24 = arith.addf %21, %23 : vector<8x128xf32>
    %c0_10 = arith.constant 0 : index
    %c0_11 = arith.constant 0 : index
    %25 = vector.load %arg5[%c0_10, %c0_11] : memref<8x128xf32, #tpu.memory_space<vmem>>, vector<8x128xf32>
    tpu.vector_store %arg5[%c0_10, %c0_11], %24 {strides = array<i32>} : memref<8x128xf32, #tpu.memory_space<vmem>>, vector<8x128xf32>,
    %c0_i32_12 = arith.constant 0 : i32
    %26 = arith.cmpi eq, %arg1, %c0_i32_12 : i32
    %27 = arith.extui %26 : i1 to i32
    %c0_i32_13 = arith.constant 0 : i32
    %28 = arith.cmpi ne, %27, %c0_i32_13 : i32
    scf.if %28 {
      %c0_14 = arith.constant 0 : index
      %c0_15 = arith.constant 0 : index
      %29 = vector.load %arg5[%c0_14, %c0_15] : memref<8x128xf32, #tpu.memory_space<vmem>>, vector<8x128xf32>
      %30 = vector.shape_cast %29 : vector<8x128xf32> to vector<1x8x128xf32>
      %cst_16 = arith.constant dense<0.000000e+00> : vector<1xf32>
      %31 = vector.multi_reduction <add>, %30, %cst_16 [1, 2] : vector<1x8x128xf32> to vector<1xf32>
      %32 = vector.shape_cast %31 : vector<1xf32> to vector<1x1x1xf32>
      %33 = vector.extract %32[0, 0, 0] : f32 from vector<1x1x1xf32>
      %cst_17 = arith.constant 0.000000e+00 : f32
      %34 = arith.subf %cst_17, %33 : f32
      %c0_18 = arith.constant 0 : index
      %c0_19 = arith.constant 0 : index
      %35 = memref.load %arg4[%c0_18, %c0_19] : memref<1x1xf32, #tpu.memory_space<smem>>
      memref.store %34, %arg4[%c0_18, %c0_19] : memref<1x1xf32, #tpu.memory_space<smem>>
    } else {
    }
    return
  }
  func.func @transform_0(%arg0: i32, %arg1: i32) -> (i32, i32) {
    %c1_i32 = arith.constant 1 : i32
    %0 = arith.muli %arg0, %c1_i32 : i32
    %1 = arith.addi %0, %arg1 : i32
    %c0_i32 = arith.constant 0 : i32
    %c0_i32_0 = arith.constant 0 : i32
    return %1, %c0_i32 : i32, i32
  }
  func.func @transform_1(%arg0: i32, %arg1: i32) -> (i32, i32) {
    %c1_i32 = arith.constant 1 : i32
    %0 = arith.muli %arg0, %c1_i32 : i32
    %1 = arith.addi %0, %arg1 : i32
    %c0_i32 = arith.constant 0 : i32
    %c0_i32_0 = arith.constant 0 : i32
    return %1, %c0_i32 : i32, i32
  }
  func.func @transform_2(%arg0: i32, %arg1: i32) -> (i32, i32) {
    %c0_i32 = arith.constant 0 : i32
    %c0_i32_0 = arith.constant 0 : i32
    return %arg0, %c0_i32 : i32, i32
  }
}

</mosaic_0001>

<llo_original>
// kernel: tpu_custom_call.1
$region0: #{tpu_custom_call.1}
  #allocation0 [shape = 'u32[]', space=smem, size = 0x4, offset = 0x4, fixed_abs, tag = 'smem constant byte address 0x4 - core index']
  #allocation1 [shape = 'u32[144,128]{1,0:T(1,128)}', space=vmem, size = 0x12000, scoped, tag = 'internal scratch']
  #allocation2 [shape = 'f32[8,128]{1,0:T(8,128)}', space=vmem, size = 0x1000, scoped, tag = 'scratch operand']
  %s0 = inlined_call_operand.hbm [shape: f32[16,128], index: 0, kind: input, shape index: {}]
  %s1 = inlined_call_operand.hbm [shape: f32[16,128], index: 1, kind: input, shape index: {}]
  %s2 = inlined_call_operand.hbm [shape: f32[1,1], index: 2, kind: output, shape index: {}]
  %s3 = sld [smem:[#allocation0]]
  $region34: #{tpu_custom_call.1} parent=0
    _
  %s5 = ssub.s32 1, %s3
  %s6 = scalar_select 0, %s5, %s3
  $region1: #{tpu_custom_call.1} parent=0
    #allocation3 [shape = 'u8[8192]{0}', space=vmem, size = 0x2000, scoped, tag = 'input window, operand 0, single buffered']
    #allocation4 [shape = 's32[1]{0}', space=sflag, size = 0x4, scoped, tag = 'scoped memory for tpu_custom_call.1']
    #allocation5 [shape = 's32[1]{0}', space=sflag, size = 0x4, scoped, tag = 'scoped memory for tpu_custom_call.1']
    #allocation6 [shape = 'u8[8192]{0}', space=vmem, size = 0x2000, scoped, tag = 'input window, operand 1, single buffered']
    #allocation7 [shape = 's32[1]{0}', space=sflag, size = 0x4, scoped, tag = 'scoped memory for tpu_custom_call.1']
    #allocation8 [shape = 'u8[512]{0}', space=smem, size = 0x200, scoped, tag = 'output window, operand 0, single buffered']
    %7 = vsyncpa [#allocation4], 0
    %8 = vsyncpa [#allocation7], 0
    %9 = vsyncpa [#allocation5], 0
    // Predicated region
    $region2: #{tpu_custom_call.1} parent=1 // pred_check
      _
    $region3: #{tpu_custom_call.1} parent=1 // pred_check_branch
      %11 = sbr.rel (0) target = $region5
    $region4: #{tpu_custom_call.1} parent=1 // pred_region
      %s12 = sadd.s32 0, 0
      %s13 = smul.u32 2, %s12
      %s15 = ssub.s32 256, 256
      %16 = vsyncadd [#allocation4], %s15
      %s17 = smul.addr %s13, 128
      %s18 = scalar_lea.hbm %s0, %s17
      %s19 = sshll.u32 [#allocation3], 4
      %s20 = int_to_ptr.vmem [resolvable:$true] %s19
      %25 = dma.hbm_to_vmem [thread:$0]  %s18, 256, %s20, [#allocation4], 128, 128, 8
    $region5: #{tpu_custom_call.1} parent=1 // pred_fallthru
      _
    // Predicated region
    $region6: #{tpu_custom_call.1} parent=1 // pred_check
      _
    $region7: #{tpu_custom_call.1} parent=1 // pred_check_branch
      %27 = sbr.rel (0) target = $region9
    $region8: #{tpu_custom_call.1} parent=1 // pred_region
      %s28 = sadd.s32 0, 0
      %s29 = smul.u32 2, %s28
      %s31 = ssub.s32 256, 256
      %32 = vsyncadd [#allocation7], %s31
      %s33 = smul.addr %s29, 128
      %s34 = scalar_lea.hbm %s1, %s33
      %s35 = sshll.u32 [#allocation6], 4
      %s36 = int_to_ptr.vmem [resolvable:$true] %s35
      %41 = dma.hbm_to_vmem [thread:$0]  %s34, 256, %s36, [#allocation7], 128, 128, 8
    $region9: #{tpu_custom_call.1} parent=1 // pred_fallthru
      _
    // Predicated region
    $region10: #{tpu_custom_call.1} parent=1 // pred_check
      _
    $region11: #{tpu_custom_call.1} parent=1 // pred_check_branch
      %43 = sbr.rel (0) target = $region13
    $region12: #{tpu_custom_call.1} parent=1 // pred_region
      %44 = dma.done [#allocation4], 256
    $region13: #{tpu_custom_call.1} parent=1 // pred_fallthru
      _
    // Predicated region
    $region14: #{tpu_custom_call.1} parent=1 // pred_check
      _
    $region15: #{tpu_custom_call.1} parent=1 // pred_check_branch
      %46 = sbr.rel (0) target = $region17
    $region16: #{tpu_custom_call.1} parent=1 // pred_region
      %47 = dma.done [#allocation7], 256
    $region17: #{tpu_custom_call.1} parent=1 // pred_fallthru
      _
    %s48 = sadd.s32 0, 0
    %s49 = smul.u32 2, %s48
    %s50 = sadd.s32 0, 0
    %s51 = smul.u32 2, %s50
    %p52 = scmp.eq.s32.totalorder 0, 0
    // Predicated region
    $region18: #{tpu_custom_call.1} parent=1 // pred_check
      %p53 = pneg %p52
    $region19: #{tpu_custom_call.1} parent=1 // pred_check_branch
      %55 = sbr.rel (%p53) target = $region21
    $region20: #{tpu_custom_call.1} parent=1 // pred_region
      %56 = vst [vmem:[#allocation2] sm:$0xff] 0.0
    $region21: #{tpu_custom_call.1} parent=1 // pred_fallthru
      _
    %v57 = vld [vmem:[#allocation3] sm:$0xff]
    %v58 = vld [vmem:[#allocation3 + $0x8] sm:$0xff]
    %v59 = vld [vmem:[#allocation6] sm:$0xff]
    %v60 = vld [vmem:[#allocation6 + $0x8] sm:$0xff]
    %v61 = vlog2.pop %v57
    %v62 = vmul.f32 %v61, 0.6931472
    %v63 = vlog2.pop %v58
    %v64 = vmul.f32 %v63, 0.6931472
    %v65 = vmax.f32 %v62, -100.0
    %v66 = vmax.f32 %v64, -100.0
    %v67 = vsub.f32 1.0, %v57
    %v68 = vsub.f32 1.0, %v58
    %v69 = vlog2.pop %v67
    %v70 = vmul.f32 %v69, 0.6931472
    %v71 = vlog2.pop %v68
    %v72 = vmul.f32 %v71, 0.6931472
    %v73 = vmax.f32 %v70, -100.0
    %v74 = vmax.f32 %v72, -100.0
    %v75 = vsub.f32 %v65, %v73
    %v76 = vsub.f32 %v66, %v74
    %v77 = vmul.f32 %v59, %v75
    %v78 = vmul.f32 %v60, %v76
    %v79 = vadd.f32 %v77, %v73
    %v80 = vadd.f32 %v78, %v74
    %v81 = vmul.f32 %v79, 1.442695
    %v82 = vpow.pop %v81
    %v83 = vmul.f32 %v80, 1.442695
    %v84 = vpow.pop %v83
    %v85 = vsub.f32 1.0, %v82
    %v86 = vsub.f32 1.0, %v84
    %v87 = vmul.f32 %v85, %v85
    %v88 = vmul.f32 %v86, %v86
    %v89 = vmul.f32 %v87, %v79
    %v90 = vmul.f32 %v88, %v80
    %v91 = vld [vmem:[#allocation2] sm:$0xff]
    %v92 = vadd.f32 %v89, %v90
    %v93 = vadd.f32 %v91, %v92
    %94 = vst [vmem:[#allocation2] sm:$0xff] %v93
    // Predicated region
    $region22: #{tpu_custom_call.1} parent=1 // pred_check
      %p95 = pneg %p52
    $region23: #{tpu_custom_call.1} parent=1 // pred_check_branch
      %97 = sbr.rel (%p95) target = $region25
    $region24: #{tpu_custom_call.1} parent=1 // pred_region
      %v98 = vld [vmem:[#allocation2] sm:$0xff]
      %99 = vadd.xlane.f32.xlu0 %v98
      %v100 = vpop.xlane.xlu0 %99
      %v101 = vrot.slane %v100, 4
      %v102 = vadd.f32 %v100, %v101
      %v103 = vrot.slane %v102, 2
      %v104 = vadd.f32 %v102, %v103
      %v105 = vrot.slane %v104, 1
      %v106 = vadd.f32 %v104, %v105
      %s107 = vtos %v106
      %s108 = ssub.f32 0.0, %s107
      %s109 = scalar_lea.smem [#allocation8], 0
      %110 = sst [smem:[%s109]] %s108
    $region25: #{tpu_custom_call.1} parent=1 // pred_fallthru
      _
    // Predicated region
    $region26: #{tpu_custom_call.1} parent=1 // pred_check
      _
    $region27: #{tpu_custom_call.1} parent=1 // pred_check_branch
      %112 = sbr.rel (0) target = $region29
    $region28: #{tpu_custom_call.1} parent=1 // pred_region
      %s114 = ssub.s32 16, 16
      %115 = vsyncadd [#allocation5], %s114
      %118 = dma.smem_to_hbm [#allocation8], 16, %s2, [#allocation5]
    $region29: #{tpu_custom_call.1} parent=1 // pred_fallthru
      _
    // Predicated region
    $region30: #{tpu_custom_call.1} parent=1 // pred_check
      _
    $region31: #{tpu_custom_call.1} parent=1 // pred_check_branch
      %120 = sbr.rel (0) target = $region33
    $region32: #{tpu_custom_call.1} parent=1 // pred_region
      %121 = dma.done [#allocation5], 16
    $region33: #{tpu_custom_call.1} parent=1 // pred_fallthru
      _
    %122 = sfence
    %123 = vsyncpa [#allocation4], 1
    %124 = vsyncpa [#allocation7], 1
    %125 = vsyncpa [#allocation5], 1

</llo_original>
